<compile_context>
chip_gen: v5e
topology: v5e:2x2
jax: 0.10.0
libtpu: 0.0.40
codegen_flags: <defaults>
</compile_context>

<pallas_src>
import jax
import jax.numpy as jnp
from jax.experimental import pallas as pl
from jax.experimental.pallas import tpu as pltpu


_NEG_SLOPE = 0.4
_LANE = 128
_SMALL_OUT_BYTES = 8 << 20     # gridless whole-array path up to this output size
_TILE_W = 512                  # lane-tile width for the tiled path (128-multiple)
_VMEM_LIMIT = 32 << 20         # explicit scoped-VMEM cap, safe on v5e/v6e/v7x


def _round_up(n, m):
    return (n + m - 1) // m * m


def _leaky_relu(x):
    # identical to jnp.where(x >= 0, x, slope*x) for 0 < slope < 1
    return jnp.maximum(x, jnp.float32(_NEG_SLOPE) * x)


# ----------------------------------------------------------------------------
# Pallas kernel: fused  leaky_relu(leaky_relu(x*w1+b1) * w2 + b2)
# Works unchanged for both the gridless and the tiled path (pure broadcasts).
# ----------------------------------------------------------------------------
def _spectrogram_upsampler_kernel(x_ref, w1_ref, b1_ref, w2_ref, b2_ref, o_ref):
    # x:  [b,1,1]   w1,b1: [1,1,w]   w2,b2: [1,C,1]   out: [b,C,w]
    h = _leaky_relu(x_ref[...] * w1_ref[...] + b1_ref[...])   # [b,1,w]  (VPU)
    y = _leaky_relu(h * w2_ref[...] + b2_ref[...])            # [b,C,w]  (VPU)
    o_ref[...] = y.astype(o_ref.dtype)


# ----------------------------------------------------------------------------
# Module wrapper: PyTorch-layout params -> padded kernel layouts -> pallas_call
# ----------------------------------------------------------------------------
def init_params(key, residual_channels: int, window_size: int):
    """nn.Linear(1, out) default init: U(-1/sqrt(1), 1/sqrt(1)) = U(-1, 1)."""
    k1, k2, k3, k4 = jax.random.split(key, 4)
    w1 = jax.random.uniform(k1, (window_size, 1), jnp.float32, -1.0, 1.0)
    b1 = jax.random.uniform(k2, (window_size,), jnp.float32, -1.0, 1.0)
    w2 = jax.random.uniform(k3, (residual_channels, 1), jnp.float32, -1.0, 1.0)
    b2 = jax.random.uniform(k4, (residual_channels,), jnp.float32, -1.0, 1.0)
    return w1, b1, w2, b2


def spectrogram_upsampler_forward(x, params, out_dtype=jnp.float32,
                                  force_tiled=False):
    """x: [B, 1] float  ->  [B, residual_channels, window_size] out_dtype."""
    w1, b1, w2, b2 = params                       # torch layouts
    W = w1.shape[0]
    C = w2.shape[0]
    B = x.shape[0]
    itemsize = jnp.dtype(out_dtype).itemsize

    # --- path selection + lane padding (always a multiple of 128) -----------
    w128 = _round_up(W, _LANE)
    gridless = (B * C * w128 * itemsize <= _SMALL_OUT_BYTES) and not force_tiled
    if gridless:
        tw = wp = w128
        grid = None
    else:
        tw = min(_TILE_W, w128)
        wp = _round_up(W, tw)
        grid = (B, wp // tw)

    # --- pack params into kernel layouts (zero-pad the lane dim) ------------
    x3 = x.astype(jnp.float32).reshape(B, 1, 1)
    w1k = jnp.zeros((1, 1, wp), jnp.float32).at[0, 0, :W].set(
        w1[:, 0].astype(jnp.float32))
    b1k = jnp.zeros((1, 1, wp), jnp.float32).at[0, 0, :W].set(
        b1.astype(jnp.float32))
    # (1,C,1) pads the trailing dim to 128 lanes in VMEM; negligible and kept
    # resident in the tiled path via constant index_map.
    w2k = w2.astype(jnp.float32).reshape(1, C, 1)
    b2k = b2.astype(jnp.float32).reshape(1, C, 1)

    cost = pl.CostEstimate(
        flops=4 * B * wp + 4 * B * C * wp,        # mul+add+leaky per layer
        transcendentals=0,
        bytes_accessed=4 * (B + 2 * wp + 2 * C) + B * C * wp * itemsize,
    )

    if grid is None:
        out = pl.pallas_call(
            _spectrogram_upsampler_kernel,
            out_shape=jax.ShapeDtypeStruct((B, C, wp), out_dtype),
            in_specs=[
                pl.BlockSpec(memory_space=pltpu.VMEM),   # x   [B,1,1]
                pl.BlockSpec(memory_space=pltpu.VMEM),   # w1  [1,1,Wp]
                pl.BlockSpec(memory_space=pltpu.VMEM),   # b1  [1,1,Wp]
                pl.BlockSpec(memory_space=pltpu.VMEM),   # w2  [1,C,1]
                pl.BlockSpec(memory_space=pltpu.VMEM),   # b2  [1,C,1]
            ],
            out_specs=pl.BlockSpec(memory_space=pltpu.VMEM),
            compiler_params=pltpu.CompilerParams(vmem_limit_bytes=_VMEM_LIMIT),
            cost_estimate=cost,
        )(x3, w1k, b1k, w2k, b2k)
    else:
        out = pl.pallas_call(
            _spectrogram_upsampler_kernel,
            out_shape=jax.ShapeDtypeStruct((B, C, wp), out_dtype),
            grid=grid,
            in_specs=[
                pl.BlockSpec((1, 1, 1), lambda b, wj: (b, 0, 0)),    # x scalar
                pl.BlockSpec((1, 1, tw), lambda b, wj: (0, 0, wj)),  # w1 tile
                pl.BlockSpec((1, 1, tw), lambda b, wj: (0, 0, wj)),  # b1 tile
                pl.BlockSpec((1, C, 1), lambda b, wj: (0, 0, 0)),    # w2 resident
                pl.BlockSpec((1, C, 1), lambda b, wj: (0, 0, 0)),    # b2 resident
            ],
            out_specs=pl.BlockSpec((1, C, tw), lambda b, wj: (b, 0, wj)),
            compiler_params=pltpu.CompilerParams(
                vmem_limit_bytes=_VMEM_LIMIT,
                dimension_semantics=("parallel", "parallel"),
            ),
            cost_estimate=cost,
        )(x3, w1k, b1k, w2k, b2k)

    return out[:, :, :W] if wp != W else out


# ----------------------------------------------------------------------------
# Pure-JAX reference (mirrors the PyTorch forward op-for-op).
# ----------------------------------------------------------------------------
def _ref_forward(x, params):
    w1, b1, w2, b2 = params                              # torch layouts
    x = x.astype(jnp.float32)
    h = x[:, None, :] @ w1.T + b1                        # [B,1,1]@[1,W] -> [B,1,W]
    h = jnp.where(h >= 0, h, _NEG_SLOPE * h)
    hp = jnp.transpose(h, (0, 2, 1))                     # [B, W, 1]
    y = hp @ w2.T + b2                                   # [B, W, C]
    y = jnp.transpose(y, (0, 2, 1))                      # [B, C, W]
    return jnp.where(y >= 0, y, _NEG_SLOPE * y)


if __name__ == "__main__":
    key = jax.random.PRNGKey(0)
    batch = 3
    residual_channels = 8      # C
    window_size = 200          # W (not 128-aligned -> exercises lane padding)

    pkey, xkey = jax.random.split(key)
    params = init_params(pkey, residual_channels, window_size)
    x = jax.random.normal(xkey, (batch, 1), jnp.float32)

    ref = _ref_forward(x, params)

    # 1) gridless whole-array path, f32 output (torch-equivalent semantics)
    out = jax.block_until_ready(spectrogram_upsampler_forward(x, params))
    assert out.shape == (batch, residual_channels, window_size)
    assert jnp.allclose(out, ref, atol=1e-5, rtol=1e-5)

    # 2) tiled / multi-core path (forced at small shapes to validate it)
    out_t = jax.block_until_ready(
        spectrogram_upsampler_forward(x, params, force_tiled=True))
    assert out_t.shape == (batch, residual_channels, window_size)
    assert jnp.allclose(out_t, ref, atol=1e-5, rtol=1e-5)

    # 3) bf16 output path (halved writeback bytes for bf16 consumers)
    out_bf16 = jax.block_until_ready(
        spectrogram_upsampler_forward(x, params, out_dtype=jnp.bfloat16))
    assert out_bf16.dtype == jnp.bfloat16
    assert jnp.allclose(out_bf16.astype(jnp.float32), ref, atol=5e-2, rtol=3e-2)

    print("KERNEL_OK")
</pallas_src>

<mosaic_0001>
module attributes {stable_mosaic.version = 11 : i64} {
  func.func @_spectrogram_upsampler_kernel(%arg0: memref<3x1x1xf32, #tpu.memory_space<vmem>>, %arg1: memref<1x1x256xf32, #tpu.memory_space<vmem>>, %arg2: memref<1x1x256xf32, #tpu.memory_space<vmem>>, %arg3: memref<1x8x1xf32, #tpu.memory_space<vmem>>, %arg4: memref<1x8x1xf32, #tpu.memory_space<vmem>>, %arg5: memref<3x8x256xf32, #tpu.memory_space<vmem>>) attributes {dimension_semantics = [], scalar_prefetch = 0 : i64, scratch_operands = 0 : i64, tpu.core_type = #tpu.core_type<tc>} {
    %c0 = arith.constant 0 : index
    %c0_0 = arith.constant 0 : index
    %c0_1 = arith.constant 0 : index
    %0 = vector.load %arg0[%c0, %c0_0, %c0_1] : memref<3x1x1xf32, #tpu.memory_space<vmem>>, vector<3x1x1xf32>
    %c0_2 = arith.constant 0 : index
    %c0_3 = arith.constant 0 : index
    %c0_4 = arith.constant 0 : index
    %1 = vector.load %arg1[%c0_2, %c0_3, %c0_4] : memref<1x1x256xf32, #tpu.memory_space<vmem>>, vector<1x1x256xf32>
    %2 = vector.broadcast %0 : vector<3x1x1xf32> to vector<3x1x256xf32>
    %3 = vector.broadcast %1 : vector<1x1x256xf32> to vector<3x1x256xf32>
    %4 = arith.mulf %2, %3 : vector<3x1x256xf32>
    %c0_5 = arith.constant 0 : index
    %c0_6 = arith.constant 0 : index
    %c0_7 = arith.constant 0 : index
    %5 = vector.load %arg2[%c0_5, %c0_6, %c0_7] : memref<1x1x256xf32, #tpu.memory_space<vmem>>, vector<1x1x256xf32>
    %6 = vector.broadcast %5 : vector<1x1x256xf32> to vector<3x1x256xf32>
    %7 = arith.addf %4, %6 : vector<3x1x256xf32>
    %cst = arith.constant 4.000000e-01 : f32
    %8 = vector.broadcast %cst : f32 to vector<3x1x256xf32>
    %9 = arith.mulf %8, %7 : vector<3x1x256xf32>
    %10 = arith.maximumf %7, %9 : vector<3x1x256xf32>
    %c0_8 = arith.constant 0 : index
    %c0_9 = arith.constant 0 : index
    %c0_10 = arith.constant 0 : index
    %11 = vector.load %arg3[%c0_8, %c0_9, %c0_10] : memref<1x8x1xf32, #tpu.memory_space<vmem>>, vector<1x8x1xf32>
    %12 = vector.broadcast %10 : vector<3x1x256xf32> to vector<3x8x256xf32>
    %13 = vector.broadcast %11 : vector<1x8x1xf32> to vector<3x8x256xf32>
    %14 = arith.mulf %12, %13 : vector<3x8x256xf32>
    %c0_11 = arith.constant 0 : index
    %c0_12 = arith.constant 0 : index
    %c0_13 = arith.constant 0 : index
    %15 = vector.load %arg4[%c0_11, %c0_12, %c0_13] : memref<1x8x1xf32, #tpu.memory_space<vmem>>, vector<1x8x1xf32>
    %16 = vector.broadcast %15 : vector<1x8x1xf32> to vector<3x8x256xf32>
    %17 = arith.addf %14, %16 : vector<3x8x256xf32>
    %cst_14 = arith.constant 4.000000e-01 : f32
    %18 = vector.broadcast %cst_14 : f32 to vector<3x8x256xf32>
    %19 = arith.mulf %18, %17 : vector<3x8x256xf32>
    %20 = arith.maximumf %17, %19 : vector<3x8x256xf32>
    %c0_15 = arith.constant 0 : index
    %c0_16 = arith.constant 0 : index
    %c0_17 = arith.constant 0 : index
    %21 = vector.load %arg5[%c0_15, %c0_16, %c0_17] : memref<3x8x256xf32, #tpu.memory_space<vmem>>, vector<3x8x256xf32>
    tpu.vector_store %arg5[%c0_15, %c0_16, %c0_17], %20 {strides = array<i32>} : memref<3x8x256xf32, #tpu.memory_space<vmem>>, vector<3x8x256xf32>,
    return
  }
}

</mosaic_0001>

<llo_original>
// kernel: tpu_custom_call.1
$region0: #{tpu_custom_call.1}
  #allocation0 [shape = 'u32[]', space=smem, size = 0x4, offset = 0x4, fixed_abs, tag = 'smem constant byte address 0x4 - core index']
  #allocation1 [shape = 'u32[72,128]{1,0:T(1,128)}', space=vmem, size = 0x9000, scoped, tag = 'internal scratch']
  %s0 = inlined_call_operand.vmem [shape: f32[3,1,1], index: 0, kind: input, shape index: {}]
  %s1 = inlined_call_operand.vmem [shape: f32[1,1,256], index: 1, kind: input, shape index: {}]
  %s2 = inlined_call_operand.vmem [shape: f32[1,1,256], index: 2, kind: input, shape index: {}]
  %s3 = inlined_call_operand.vmem [shape: f32[1,8,1], index: 3, kind: input, shape index: {}]
  %s4 = inlined_call_operand.vmem [shape: f32[1,8,1], index: 4, kind: input, shape index: {}]
  %s5 = inlined_call_operand.hbm [shape: f32[3,8,256], index: 5, kind: output, shape index: {}]
  %s6 = sld [smem:[#allocation0]]
  $region30: #{tpu_custom_call.1} parent=0
    _
  %s8 = ssub.s32 1, %s6
  %s9 = scalar_select 0, %s8, %s6
  $region1: #{tpu_custom_call.1} parent=0
    #allocation2 [shape = 'u8[24576]{0}', space=vmem, size = 0x6000, scoped, tag = 'output window, operand 0, single buffered']
    #allocation3 [shape = 's32[1]{0}', space=sflag, size = 0x4, scoped, tag = 'scoped memory for tpu_custom_call.1']
    %10 = vsyncpa [#allocation3], 0
    // Predicated region
    $region2: #{tpu_custom_call.1} parent=1 // pred_check
      _
    $region3: #{tpu_custom_call.1} parent=1 // pred_check_branch
      %12 = sbr.rel (0) target = $region5
    $region4: #{tpu_custom_call.1} parent=1 // pred_region
      _
    $region5: #{tpu_custom_call.1} parent=1 // pred_fallthru
      _
    // Predicated region
    $region6: #{tpu_custom_call.1} parent=1 // pred_check
      _
    $region7: #{tpu_custom_call.1} parent=1 // pred_check_branch
      %14 = sbr.rel (0) target = $region9
    $region8: #{tpu_custom_call.1} parent=1 // pred_region
      _
    $region9: #{tpu_custom_call.1} parent=1 // pred_fallthru
      _
    // Predicated region
    $region10: #{tpu_custom_call.1} parent=1 // pred_check
      _
    $region11: #{tpu_custom_call.1} parent=1 // pred_check_branch
      %16 = sbr.rel (0) target = $region13
    $region12: #{tpu_custom_call.1} parent=1 // pred_region
      _
    $region13: #{tpu_custom_call.1} parent=1 // pred_fallthru
      _
    // Predicated region
    $region14: #{tpu_custom_call.1} parent=1 // pred_check
      _
    $region15: #{tpu_custom_call.1} parent=1 // pred_check_branch
      %18 = sbr.rel (0) target = $region17
    $region16: #{tpu_custom_call.1} parent=1 // pred_region
      _
    $region17: #{tpu_custom_call.1} parent=1 // pred_fallthru
      _
    // Predicated region
    $region18: #{tpu_custom_call.1} parent=1 // pred_check
      _
    $region19: #{tpu_custom_call.1} parent=1 // pred_check_branch
      %20 = sbr.rel (0) target = $region21
    $region20: #{tpu_custom_call.1} parent=1 // pred_region
      _
    $region21: #{tpu_custom_call.1} parent=1 // pred_fallthru
      _
    %v21 = vld [vmem:[%s0] sm:$0x1]
    %v22 = vld [vmem:[%s0 + $0x1] sm:$0x1]
    %v23 = vld [vmem:[%s0 + $0x2] sm:$0x1]
    %v24 = vld [vmem:[%s1] sm:$0x3]
    %26 = vset.pattern.permute.xlu0 0
    %27 = vperm.xlu0 %26, %v21
    %v28 = vpop.permute.xlu0 %27
    %v30 = vperm.slane %v28, 0
    %32 = vset.pattern.permute.xlu0 0
    %33 = vperm.xlu0 %32, %v22
    %v34 = vpop.permute.xlu0 %33
    %v36 = vperm.slane %v34, 0
    %38 = vset.pattern.permute.xlu0 0
    %39 = vperm.xlu0 %38, %v23
    %v40 = vpop.permute.xlu0 %39
    %v42 = vperm.slane %v40, 0
    %v43 = vmul.f32 %v30, %v24
    %v44 = vmul.f32 %v36, %v24
    %v45 = vmul.f32 %v42, %v24
    %v46 = vld [vmem:[%s2] sm:$0x3]
    %v47 = vadd.f32 %v43, %v46
    %v48 = vadd.f32 %v44, %v46
    %v49 = vadd.f32 %v45, %v46
    %v50 = vmul.f32 %v47, 0.4
    %v51 = vmul.f32 %v48, 0.4
    %v52 = vmul.f32 %v49, 0.4
    %v53 = vmax.f32 %v47, %v50
    %v54 = vmax.f32 %v48, %v51
    %v55 = vmax.f32 %v49, %v52
    %v56 = vld [vmem:[%s3] sm:$0xff]
    %v60 = vperm.slane %v53, 0
    %v61 = vperm.slane %v53, 1
    %v62 = vperm.slane %v54, 0
    %v63 = vperm.slane %v54, 1
    %v64 = vperm.slane %v55, 0
    %v65 = vperm.slane %v55, 1
    %73 = vset.pattern.permute.xlu0 0
    %74 = vperm.xlu0 %73, %v56
    %v75 = vpop.permute.xlu0 %74
    %v77 = vmul.f32 %v60, %v75
    %v78 = vmul.f32 %v61, %v75
    %v79 = vmul.f32 %v62, %v75
    %v80 = vmul.f32 %v63, %v75
    %v81 = vmul.f32 %v64, %v75
    %v82 = vmul.f32 %v65, %v75
    %v83 = vld [vmem:[%s4] sm:$0xff]
    %85 = vset.pattern.permute.xlu0 0
    %86 = vperm.xlu0 %85, %v83
    %v87 = vpop.permute.xlu0 %86
    %v89 = vadd.f32 %v77, %v87
    %v90 = vadd.f32 %v78, %v87
    %v91 = vadd.f32 %v79, %v87
    %v92 = vadd.f32 %v80, %v87
    %v93 = vadd.f32 %v81, %v87
    %v94 = vadd.f32 %v82, %v87
    %v95 = vmul.f32 %v89, 0.4
    %v96 = vmul.f32 %v90, 0.4
    %v97 = vmul.f32 %v91, 0.4
    %v98 = vmul.f32 %v92, 0.4
    %v99 = vmul.f32 %v93, 0.4
    %v100 = vmul.f32 %v94, 0.4
    %v101 = vmax.f32 %v89, %v95
    %v102 = vmax.f32 %v90, %v96
    %v103 = vmax.f32 %v91, %v97
    %v104 = vmax.f32 %v92, %v98
    %v105 = vmax.f32 %v93, %v99
    %v106 = vmax.f32 %v94, %v100
    %107 = vst [vmem:[#allocation2] sm:$0xff] %v101
    %108 = vst [vmem:[#allocation2 + $0x8] sm:$0xff] %v102
    %109 = vst [vmem:[#allocation2 + $0x10] sm:$0xff] %v103
    %110 = vst [vmem:[#allocation2 + $0x18] sm:$0xff] %v104
    %111 = vst [vmem:[#allocation2 + $0x20] sm:$0xff] %v105
    %112 = vst [vmem:[#allocation2 + $0x28] sm:$0xff] %v106
    // Predicated region
    $region22: #{tpu_custom_call.1} parent=1 // pred_check
      _
    $region23: #{tpu_custom_call.1} parent=1 // pred_check_branch
      %114 = sbr.rel (0) target = $region25
    $region24: #{tpu_custom_call.1} parent=1 // pred_region
      %116 = vsyncadd [#allocation3], 0
      %s117 = sshll.u32 [#allocation2], 4
      %s118 = int_to_ptr.vmem [resolvable:$true] %s117
      %s119 = sshll.u32 %s5, 4
      %s120 = int_to_ptr.hbm [resolvable:$true] %s119
      %125 = dma.vmem_to_hbm [thread:$0]  %s118, 768, %s120, [#allocation3], 256, 256, 16
    $region25: #{tpu_custom_call.1} parent=1 // pred_fallthru
      _
    // Predicated region
    $region26: #{tpu_custom_call.1} parent=1 // pred_check
      _
    $region27: #{tpu_custom_call.1} parent=1 // pred_check_branch
      %127 = sbr.rel (0) target = $region29
    $region28: #{tpu_custom_call.1} parent=1 // pred_region
      %129 = dma.done [#allocation3], 768
    $region29: #{tpu_custom_call.1} parent=1 // pred_fallthru
      _
    %130 = vsyncpa [#allocation3], 1

</llo_original>
